<compile_context>
chip_gen: v7x
topology: tpu7x:2x2x1
jax: 0.10.0
libtpu: 0.0.40
codegen_flags: <defaults>
</compile_context>

<pallas_src>
import functools

import numpy as np
import jax
import jax.numpy as jnp
from jax import lax
from jax.experimental import pallas as pl
from jax.experimental.pallas import tpu as pltpu

BN_EPS = 1e-5
MATCHING_MAX_PAIR = 8192
SUPCON_TEMPERATURE = 0.5


def _round_up(x, m):
    return ((x + m - 1) // m) * m


# ----------------------------- Pallas kernels ------------------------------

def _emit_stats(stats_ref, y, i, tile_m, n_valid, mask_last):
    """Per-tile BN partials: row0 = sum(y), row1 = sum(y*y) (slice stores).
    Only the last row tile can contain padded rows, so masking is gated."""
    def write(yv):
        stats_ref[0:1, :] = jnp.sum(yv, axis=0, keepdims=True)
        stats_ref[1:2, :] = jnp.sum(yv * yv, axis=0, keepdims=True)
        # rows 2..7 of the stats block are never read -> left unwritten.

    if not mask_last:
        write(y)
        return

    last = pl.num_programs(0) - 1

    @pl.when(i != last)
    def _():
        write(y)

    @pl.when(i == last)
    def _():
        row = lax.broadcasted_iota(jnp.int32, (y.shape[0], 1), 0) + i * tile_m
        write(jnp.where(row < n_valid, y, 0.0))


def _proj_kernel(x_ref, w1_ref, b1_ref, w2_ref, b2_ref,
                 feat_ref, ypre_ref, stats_ref, *, n_valid, tile_m, mask_last):
    """Per row tile:  h = relu(x@W1 + b1);  y = h@W2 + b2 (pre-BatchNorm).
    Operands already bf16; accumulation f32; outputs stored bf16."""
    i = pl.program_id(0)
    h = jnp.dot(x_ref[...], w1_ref[...],
                preferred_element_type=jnp.float32) + b1_ref[...]
    h = jnp.maximum(h, 0.0)
    h16 = h.astype(jnp.bfloat16)
    y = jnp.dot(h16, w2_ref[...],
                preferred_element_type=jnp.float32) + b2_ref[...]
    feat_ref[...] = h16
    ypre_ref[...] = y.astype(jnp.bfloat16)
    _emit_stats(stats_ref, y, i, tile_m, n_valid, mask_last)


def _proj_seg_kernel(ids_ref, x_ref, w1_ref, b1_ref, w2_ref, b2_ref,
                     ypre_ref, stats_ref, sfeat_ref,
                     *, s_pad, n_valid, tile_m, mask_last):
    """View2 projection with the per-superpoint feature-sum fused in
    (scatter_mean numerator), so the backbone features never hit HBM."""
    i = pl.program_id(0)

    @pl.when(i == 0)
    def _():
        sfeat_ref[...] = jnp.zeros_like(sfeat_ref)

    h = jnp.dot(x_ref[...], w1_ref[...],
                preferred_element_type=jnp.float32) + b1_ref[...]
    h = jnp.maximum(h, 0.0)
    h16 = h.astype(jnp.bfloat16)
    y = jnp.dot(h16, w2_ref[...],
                preferred_element_type=jnp.float32) + b2_ref[...]
    ypre_ref[...] = y.astype(jnp.bfloat16)
    _emit_stats(stats_ref, y, i, tile_m, n_valid, mask_last)

    ids = ids_ref[...]                                      # (1, tile_m) int32
    onehot = (lax.broadcasted_iota(jnp.int32, (s_pad, ids.shape[1]), 0)
              == ids).astype(jnp.bfloat16)                  # padded ids==s_pad -> all-zero col
    sfeat_ref[...] += jnp.dot(onehot, h16, preferred_element_type=jnp.float32)


def _seg_g_kernel(ids_ref, ypre_ref, mean_ref, istd_ref, sg_ref, *, s_pad):
    """Per-superpoint sum of relu(BN(ypre)) via one-hot matmul, accumulated
    across row tiles."""
    @pl.when(pl.program_id(0) == 0)
    def _():
        sg_ref[...] = jnp.zeros_like(sg_ref)

    ids = ids_ref[...]
    onehot = (lax.broadcasted_iota(jnp.int32, (s_pad, ids.shape[1]), 0)
              == ids).astype(jnp.bfloat16)
    g = jnp.maximum((ypre_ref[...].astype(jnp.float32) - mean_ref[...])
                    * istd_ref[...], 0.0)
    sg_ref[...] += jnp.dot(onehot, g.astype(jnp.bfloat16),
                           preferred_element_type=jnp.float32)


def _supcon_update(logits, pos_i8, den_i8, mmax, lsum, psum, pcnt):
    """Online (streaming) update of the SupCon statistics for one Ns tile.
    den_i8 is the pre-combined denominator mask (pos | neg)."""
    pos = pos_i8 > 0
    denom = den_i8 > 0
    tmax = jnp.max(jnp.where(denom, logits, -1e30), axis=-1, keepdims=True)
    m_new = jnp.maximum(mmax[...], tmax)
    alpha = jnp.exp(mmax[...] - m_new)
    p = jnp.where(denom, jnp.exp(logits - m_new), 0.0)
    lsum[...] = alpha * lsum[...] + jnp.sum(p, axis=-1, keepdims=True)
    mmax[...] = m_new
    psum[...] = psum[...] + jnp.sum(jnp.where(pos, logits, 0.0),
                                    axis=-1, keepdims=True)
    pcnt[...] = pcnt[...] + jnp.sum(pos.astype(jnp.float32),
                                    axis=-1, keepdims=True)


def _supcon_finalize(o_ref, mmax, lsum, psum, pcnt, n_rows):
    """loss = mean_i [ logsumexp_denom(logits_i) - mean_{j in P_i} logits_ij ]."""
    has = pcnt[...] > 0.0
    lse = jnp.where(has, mmax[...] + jnp.log(jnp.maximum(lsum[...], 1e-30)), 0.0)
    per_row = jnp.where(has, lse - psum[...] / jnp.maximum(pcnt[...], 1.0), 0.0)
    row_id = lax.broadcasted_iota(jnp.int32, per_row.shape, 0)
    total = jnp.sum(jnp.where(row_id < n_rows, per_row, 0.0), keepdims=True)
    o_ref[...] = total / jnp.float32(n_rows)


def _fused_sim_supcon_kernel(a_ref, b_ref, pos_ref, den_ref, o_ref,
                             mmax, lsum, psum, pcnt, *, n_rows):
    """Similarity matmul + SupConLoss, streamed over Ns tiles.  Anchors are
    pre-normalized and pre-scaled by 1/T in the wrapper (they are resident)."""
    j = pl.program_id(0)

    @pl.when(j == 0)
    def _():
        mmax[...] = jnp.full_like(mmax, -1e30)
        lsum[...] = jnp.zeros_like(lsum)
        psum[...] = jnp.zeros_like(psum)
        pcnt[...] = jnp.zeros_like(pcnt)

    b = b_ref[...].astype(jnp.float32)
    b = b / (jnp.sqrt(jnp.sum(b * b, axis=-1, keepdims=True)) + 1e-7)
    sim = lax.dot_general(a_ref[...], b.astype(jnp.bfloat16),
                          (((1,), (1,)), ((), ())),
                          preferred_element_type=jnp.float32)
    _supcon_update(sim, pos_ref[...], den_ref[...], mmax, lsum, psum, pcnt)

    @pl.when(j == pl.num_programs(0) - 1)
    def _():
        _supcon_finalize(o_ref, mmax, lsum, psum, pcnt, n_rows)


def _supcon_from_sim_kernel(sim_ref, pos_ref, den_ref, o_ref,
                            mmax, lsum, psum, pcnt, *, inv_t, n_rows):
    j = pl.program_id(0)

    @pl.when(j == 0)
    def _():
        mmax[...] = jnp.full_like(mmax, -1e30)
        lsum[...] = jnp.zeros_like(lsum)
        psum[...] = jnp.zeros_like(psum)
        pcnt[...] = jnp.zeros_like(pcnt)

    _supcon_update(sim_ref[...] * inv_t, pos_ref[...], den_ref[...],
                   mmax, lsum, psum, pcnt)

    @pl.when(j == pl.num_programs(0) - 1)
    def _():
        _supcon_finalize(o_ref, mmax, lsum, psum, pcnt, n_rows)


def _sim2_kernel(a_ref, bpre_ref, mean_ref, istd_ref, o_ref):
    """sim_2 tile: (pre-normalized anchor_gq) @ normalize(relu(BN(ypre1[idx]))).T"""
    b = jnp.maximum((bpre_ref[...].astype(jnp.float32) - mean_ref[...])
                    * istd_ref[...], 0.0)
    b = b / (jnp.sqrt(jnp.sum(b * b, axis=-1, keepdims=True)) + 1e-7)
    o_ref[...] = lax.dot_general(a_ref[...], b.astype(jnp.bfloat16),
                                 (((1,), (1,)), ((), ())),
                                 preferred_element_type=jnp.float32)


# ----------------------------- kernel wrappers ------------------------------

def projection_forward(x_pad, w1, b1, w2, b2, n_valid, tile_m):
    n_pad, cin_pad = x_pad.shape
    c_pad = w1.shape[1]
    nt = n_pad // tile_m
    kern = functools.partial(_proj_kernel, n_valid=int(n_valid), tile_m=tile_m,
                             mask_last=(n_pad != int(n_valid)))
    return pl.pallas_call(
        kern,
        out_shape=(jax.ShapeDtypeStruct((n_pad, c_pad), jnp.bfloat16),
                   jax.ShapeDtypeStruct((n_pad, c_pad), jnp.bfloat16),
                   jax.ShapeDtypeStruct((nt * 8, c_pad), jnp.float32)),
        grid_spec=pltpu.PrefetchScalarGridSpec(
            num_scalar_prefetch=0, grid=(nt,),
            in_specs=[pl.BlockSpec((tile_m, cin_pad), lambda i: (i, 0)),
                      pl.BlockSpec((cin_pad, c_pad), lambda i: (0, 0)),
                      pl.BlockSpec((1, c_pad), lambda i: (0, 0)),
                      pl.BlockSpec((c_pad, c_pad), lambda i: (0, 0)),
                      pl.BlockSpec((1, c_pad), lambda i: (0, 0))],
            out_specs=[pl.BlockSpec((tile_m, c_pad), lambda i: (i, 0)),
                       pl.BlockSpec((tile_m, c_pad), lambda i: (i, 0)),
                       pl.BlockSpec((8, c_pad), lambda i: (i, 0))]),
        compiler_params=pltpu.CompilerParams(
            dimension_semantics=("parallel",)),
    )(x_pad, w1, b1, w2, b2)


def projection_seg_forward(ids_row, x_pad, w1, b1, w2, b2, n_valid, tile_m, s_pad):
    n_pad, cin_pad = x_pad.shape
    c_pad = w1.shape[1]
    nt = n_pad // tile_m
    kern = functools.partial(_proj_seg_kernel, s_pad=s_pad, n_valid=int(n_valid),
                             tile_m=tile_m, mask_last=(n_pad != int(n_valid)))
    return pl.pallas_call(
        kern,
        out_shape=(jax.ShapeDtypeStruct((n_pad, c_pad), jnp.bfloat16),
                   jax.ShapeDtypeStruct((nt * 8, c_pad), jnp.float32),
                   jax.ShapeDtypeStruct((s_pad, c_pad), jnp.float32)),
        grid_spec=pltpu.PrefetchScalarGridSpec(
            num_scalar_prefetch=0, grid=(nt,),
            in_specs=[pl.BlockSpec((1, tile_m), lambda i: (0, i)),
                      pl.BlockSpec((tile_m, cin_pad), lambda i: (i, 0)),
                      pl.BlockSpec((cin_pad, c_pad), lambda i: (0, 0)),
                      pl.BlockSpec((1, c_pad), lambda i: (0, 0)),
                      pl.BlockSpec((c_pad, c_pad), lambda i: (0, 0)),
                      pl.BlockSpec((1, c_pad), lambda i: (0, 0))],
            out_specs=[pl.BlockSpec((tile_m, c_pad), lambda i: (i, 0)),
                       pl.BlockSpec((8, c_pad), lambda i: (i, 0)),
                       pl.BlockSpec((s_pad, c_pad), lambda i: (0, 0))]),
        compiler_params=pltpu.CompilerParams(
            dimension_semantics=("arbitrary",)),   # resident seg-sum accumulator
    )(ids_row, x_pad, w1, b1, w2, b2)


def _bn_stats(stats, n_valid):
    c_pad = stats.shape[1]
    st = stats.reshape(-1, 8, c_pad)
    total = jnp.sum(st[:, 0, :], axis=0)
    total_sq = jnp.sum(st[:, 1, :], axis=0)
    mean = total / float(n_valid)
    var = jnp.maximum(total_sq / float(n_valid) - mean * mean, 0.0)
    inv_std = lax.rsqrt(var + BN_EPS)
    return mean[None, :], inv_std[None, :]


def segment_g_sums(ids_row, ypre, mean, istd, s_pad, tile_m):
    n_pad, c_pad = ypre.shape
    nt = n_pad // tile_m
    kern = functools.partial(_seg_g_kernel, s_pad=s_pad)
    return pl.pallas_call(
        kern,
        out_shape=jax.ShapeDtypeStruct((s_pad, c_pad), jnp.float32),
        grid_spec=pltpu.PrefetchScalarGridSpec(
            num_scalar_prefetch=0, grid=(nt,),
            in_specs=[pl.BlockSpec((1, tile_m), lambda i: (0, i)),
                      pl.BlockSpec((tile_m, c_pad), lambda i: (i, 0)),
                      pl.BlockSpec((1, c_pad), lambda i: (0, 0)),
                      pl.BlockSpec((1, c_pad), lambda i: (0, 0))],
            out_specs=pl.BlockSpec((s_pad, c_pad), lambda i: (0, 0))),
        compiler_params=pltpu.CompilerParams(
            dimension_semantics=("arbitrary",)),
    )(ids_row, ypre, mean, istd)


def fused_sim_supcon(anchors_scaled, samples, pos_i8, den_i8, n_rows, tile_ns):
    m_pad, c_pad = anchors_scaled.shape
    ns_pad = samples.shape[0]
    nt = ns_pad // tile_ns
    kern = functools.partial(_fused_sim_supcon_kernel, n_rows=int(n_rows))
    out = pl.pallas_call(
        kern,
        out_shape=jax.ShapeDtypeStruct((1, 1), jnp.float32),
        grid_spec=pltpu.PrefetchScalarGridSpec(
            num_scalar_prefetch=0, grid=(nt,),
            in_specs=[pl.BlockSpec((m_pad, c_pad), lambda j: (0, 0)),
                      pl.BlockSpec((tile_ns, c_pad), lambda j: (j, 0)),
                      pl.BlockSpec((m_pad, tile_ns), lambda j: (0, j)),
                      pl.BlockSpec((m_pad, tile_ns), lambda j: (0, j))],
            out_specs=pl.BlockSpec((1, 1), lambda j: (0, 0)),
            scratch_shapes=[pltpu.VMEM((m_pad, 1), jnp.float32)] * 4),
        compiler_params=pltpu.CompilerParams(
            dimension_semantics=("arbitrary",)),
    )(anchors_scaled, samples, pos_i8, den_i8)
    return out[0, 0]


def supcon_from_sim(sim_pad, pos_i8, den_i8, n_rows, tile_ns,
                    temperature=SUPCON_TEMPERATURE):
    m_pad, ns_pad = sim_pad.shape
    nt = ns_pad // tile_ns
    kern = functools.partial(_supcon_from_sim_kernel,
                             inv_t=float(1.0 / temperature), n_rows=int(n_rows))
    out = pl.pallas_call(
        kern,
        out_shape=jax.ShapeDtypeStruct((1, 1), jnp.float32),
        grid_spec=pltpu.PrefetchScalarGridSpec(
            num_scalar_prefetch=0, grid=(nt,),
            in_specs=[pl.BlockSpec((m_pad, tile_ns), lambda j: (0, j)),
                      pl.BlockSpec((m_pad, tile_ns), lambda j: (0, j)),
                      pl.BlockSpec((m_pad, tile_ns), lambda j: (0, j))],
            out_specs=pl.BlockSpec((1, 1), lambda j: (0, 0)),
            scratch_shapes=[pltpu.VMEM((m_pad, 1), jnp.float32)] * 4),
        compiler_params=pltpu.CompilerParams(
            dimension_semantics=("arbitrary",)),
    )(sim_pad, pos_i8, den_i8)
    return out[0, 0]


def sim2_matrix(anchors_gq_norm, samples_gpre, mean1, istd1, tile_ns):
    m_pad, c_pad = anchors_gq_norm.shape
    ns_pad = samples_gpre.shape[0]
    nt = ns_pad // tile_ns
    return pl.pallas_call(
        _sim2_kernel,
        out_shape=jax.ShapeDtypeStruct((m_pad, ns_pad), jnp.float32),
        grid_spec=pltpu.PrefetchScalarGridSpec(
            num_scalar_prefetch=0, grid=(nt,),
            in_specs=[pl.BlockSpec((m_pad, c_pad), lambda j: (0, 0)),
                      pl.BlockSpec((tile_ns, c_pad), lambda j: (j, 0)),
                      pl.BlockSpec((1, c_pad), lambda j: (0, 0)),
                      pl.BlockSpec((1, c_pad), lambda j: (0, 0))],
            out_specs=pl.BlockSpec((m_pad, tile_ns), lambda j: (0, j))),
        compiler_params=pltpu.CompilerParams(
            dimension_semantics=("parallel",)),
    )(anchors_gq_norm, samples_gpre, mean1, istd1)


# --------------------------- host-side mask glue ----------------------------

def create_positive_mask_2(n, N):
    k = N // n
    mask = np.zeros((n, N), dtype=bool)
    for i in range(n):
        mask[i, i * k:(i + 1) * k] = True
    return mask


def create_negative_mask_from_positive_mask(positive_mask, sample_count):
    negative_mask = ~positive_mask
    n, N = negative_mask.shape
    out = np.zeros((n, N), dtype=bool)
    for i in range(n):
        neg_idx = np.nonzero(negative_mask[i])[0]
        if neg_idx.size > 1:
            sel = neg_idx[np.linspace(0, neg_idx.size - 1, sample_count).astype(np.int64)]
            out[i, sel] = True
    return out


def create_positive_mask_3(sim2, k):
    _, idx = lax.top_k(sim2, k)
    n, N = sim2.shape
    rows = jnp.arange(n)[:, None]
    mask = jnp.zeros((n, N), dtype=bool).at[rows, idx].set(True)
    return np.asarray(mask)


def create_negative_mask(n, N, sp_background_mask, sample_count=30):
    k = N // n
    mask = np.zeros((n, N), dtype=bool)
    bg_rep = np.repeat(sp_background_mask, k)
    for i in range(n):
        if sp_background_mask[i]:
            mask[i, ~bg_rep] = True
        else:
            mask[i, bg_rep] = True
        neg_idx = np.nonzero(mask[i])[0]
        if neg_idx.size > sample_count:
            sel = neg_idx[np.linspace(0, neg_idx.size - 1, sample_count).astype(np.int64)]
            mask[i] = False
            mask[i, sel] = True
        else:
            mask[i] = False
    return mask


def sparse_sample_2(region, n_samples):
    # TODO(synk): sparse_sample_2 source is not in the snippet; deterministic
    # evenly-spaced per-superpoint sampling is used (returns idx, pointers).
    idx_list = []
    ptr = [0]
    for s in range(len(n_samples)):
        ns = int(n_samples[s])
        members = np.nonzero(region == s)[0]
        if ns > 0 and members.size > 0:
            sel = members[np.linspace(0, members.size - 1, ns).astype(np.int64)]
            idx_list.append(sel)
        ptr.append(ptr[-1] + ns)
    return (np.concatenate(idx_list) if idx_list else np.zeros((0,), np.int64),
            np.array(ptr))


def _pad_mask(mask_bool, m_pad, ns_pad):
    out = np.zeros((m_pad, ns_pad), np.int8)
    out[:mask_bool.shape[0], :mask_bool.shape[1]] = mask_bool
    return jnp.asarray(out)


# ------------------------------- parameters ---------------------------------

def init_params(key, cin, cout):
    def trunc(k, shape, std=0.02):
        return jax.random.truncated_normal(k, -2.0, 2.0, shape, jnp.float32) * std
    k1, k2 = jax.random.split(key)
    # key encoders are copies of query encoders at init -> share weights here.
    return dict(
        backbone_w=trunc(k1, (cin, cout)),
        backbone_b=jnp.zeros((1, cout), jnp.float32),
        g_w=trunc(k2, (cout, cout)),
        g_b=jnp.zeros((1, cout), jnp.float32),
    )


# --------------------------------- forward ----------------------------------

def sp_fa_contrast_forward(params, data_dict):
    v1_feat_in = jnp.asarray(data_dict['view1_feat'], jnp.float32)
    v2_feat_in = jnp.asarray(data_dict['view2_feat'], jnp.float32)
    v1_region = np.asarray(data_dict['view1_region'])
    v2_region = np.asarray(data_dict['view2_region'])
    wall = np.asarray(data_dict['view1_sp_wall_mask'])
    floor_ceil = np.asarray(data_dict['view1_sp_floor_ceil_mask'])
    bg = wall | floor_ceil

    n_pts, cin = v1_feat_in.shape
    cout = params['backbone_w'].shape[1]
    cin_pad = _round_up(cin, 128)
    c_pad = _round_up(cout, 128)
    tile_m = min(1024, _round_up(n_pts, 16))   # multiple of 16 (bf16 sublane pack)
    n_pad = _round_up(n_pts, tile_m)

    def pad2(a, r, c, dt):
        return jnp.pad(a, ((0, r - a.shape[0]), (0, c - a.shape[1]))).astype(dt)

    # bf16 activations/weights feeding the MXU (halves HBM traffic, f32 accumulate)
    x1 = pad2(v1_feat_in, n_pad, cin_pad, jnp.bfloat16)
    x2 = pad2(v2_feat_in, n_pad, cin_pad, jnp.bfloat16)
    w1 = pad2(params['backbone_w'], cin_pad, c_pad, jnp.bfloat16)
    b1 = pad2(params['backbone_b'], 1, c_pad, jnp.float32)
    w2 = pad2(params['g_w'], c_pad, c_pad, jnp.bfloat16)
    b2 = pad2(params['g_b'], 1, c_pad, jnp.float32)

    S = int(max(v1_region.max(), v2_region.max())) + 1
    s_pad = _round_up(S, 8)

    # view2 region ids; padded rows map to s_pad (outside the one-hot range)
    ids2 = np.full((1, n_pad), s_pad, np.int32)
    ids2[0, :n_pts] = v2_region
    ids2 = jnp.asarray(ids2)

    # TODO(synk): the point-cloud backbone (build_model(backbone), e.g. sparse
    # conv UNet) has no clean Pallas equivalent; it is replaced by a single
    # linear+ReLU projection with frozen-key == query weights (as at init).
    feat1, ypre1, stats1 = projection_forward(x1, w1, b1, w2, b2, n_pts, tile_m)
    ypre2, stats2, seg_feat_sum = projection_seg_forward(
        ids2, x2, w1, b1, w2, b2, n_pts, tile_m, s_pad)
    mean1, istd1 = _bn_stats(stats1, n_pts)   # BN stats of g_k over view1
    mean2, istd2 = _bn_stats(stats2, n_pts)   # BN stats of g_q over view2

    v1_bc = np.bincount(v1_region, minlength=S)
    v2_bc = np.bincount(v2_region, minlength=S)
    min_bc = np.minimum(v1_bc, v2_bc)
    small = min_bc < 30
    keep = ~small
    n_keep = int(keep.sum())
    if n_keep == 0:
        # degenerate scene: no superpoint has >= 30 matched points
        z = jnp.float32(0.0)
        return dict(L_fore=z, L_fore_back=z, loss=z)

    m_pad = _round_up(n_keep, 32)

    # scatter_mean over superpoints: g-head segment sums (feat sums already fused)
    seg_g_sum = segment_g_sums(ids2, ypre2, mean2, istd2, s_pad, tile_m)
    counts = np.ones((s_pad, 1), np.float32)
    counts[:S, 0] = np.maximum(v2_bc, 1)
    counts = jnp.asarray(counts)
    seg_feat_mean = seg_feat_sum / counts
    seg_g_mean = seg_g_sum / counts

    keep_idx = np.zeros((m_pad,), np.int32)
    keep_idx[:n_keep] = np.nonzero(keep)[0]
    keep_idx = jnp.asarray(keep_idx)

    inv_t = jnp.float32(1.0 / SUPCON_TEMPERATURE)

    def l2norm(x):
        return x / (jnp.sqrt(jnp.sum(x * x, axis=-1, keepdims=True)) + 1e-7)

    # anchors are resident inside the sim kernels -> normalize once here and
    # fold 1/temperature into the Lcon anchors so the kernel has no per-tile scale.
    anchor_feat = (l2norm(jnp.take(seg_feat_mean, keep_idx, axis=0))
                   * inv_t).astype(jnp.bfloat16)            # (m_pad, c_pad)
    anchor_gq = l2norm(jnp.take(seg_g_mean, keep_idx, axis=0)).astype(jnp.bfloat16)

    # per-superpoint sampling allocation + evenly spaced sample indices (host)
    alloc = min_bc.copy()
    alloc[small] = 0
    each = int(MATCHING_MAX_PAIR / n_keep)
    alloc[keep] = 30 if each >= 30 else each
    idx_samples, _ptr = sparse_sample_2(v1_region, alloc)
    Ns = int(idx_samples.shape[0])
    if Ns == 0 or Ns // n_keep == 0:
        z = jnp.float32(0.0)
        return dict(L_fore=z, L_fore_back=z, loss=z)

    tile_ns = min(4096, _round_up(Ns, 128))
    ns_pad = _round_up(Ns, tile_ns)
    idx_pad = np.zeros((ns_pad,), np.int32)
    idx_pad[:Ns] = idx_samples
    idx_pad = jnp.asarray(idx_pad)

    samples_feat = jnp.take(feat1, idx_pad, axis=0)    # (ns_pad, c_pad) bf16
    samples_gpre = jnp.take(ypre1, idx_pad, axis=0)    # pre-BN g_k of view1, bf16

    # ---- Lcon: fused normalize + sim + SupCon (sim never hits HBM) ----
    pos = create_positive_mask_2(n_keep, Ns)
    neg_f = create_negative_mask_from_positive_mask(pos, 30)
    den_f = pos | neg_f                                 # denominator pre-combined
    Lcon = fused_sim_supcon(anchor_feat, samples_feat,
                            _pad_mask(pos, m_pad, ns_pad),
                            _pad_mask(den_f, m_pad, ns_pad),
                            n_keep, tile_ns)

    # ---- Lcon_2: sim_2 must be materialized (top-k positives) ----
    sim2_pad = sim2_matrix(anchor_gq, samples_gpre, mean1, istd1, tile_ns)
    k = Ns // n_keep
    pos2 = create_positive_mask_3(sim2_pad[:n_keep, :Ns], k)
    bg_kept = bg[keep]
    if int(bg_kept.sum()) == 0:
        Lcon_2 = jnp.float32(0.0)
    else:
        neg2 = create_negative_mask(n_keep, Ns, bg_kept, 30)
        den2 = pos2 | neg2
        Lcon_2 = supcon_from_sim(sim2_pad,
                                 _pad_mask(pos2, m_pad, ns_pad),
                                 _pad_mask(den2, m_pad, ns_pad),
                                 n_keep, tile_ns)

    # TODO(synk): torch.distributed all_reduce path omitted (single device)
    world_size = 1
    L_total = Lcon + Lcon_2
    return dict(L_fore=Lcon / world_size,
                L_fore_back=Lcon_2 / world_size,
                loss=L_total / world_size)


# ---------------------------------- main -------------------------------------

if __name__ == "__main__":
    key = jax.random.PRNGKey(0)
    k_param, k_f1, k_f2, k_c1, k_c2 = jax.random.split(key, 5)

    S = 4                      # superpoints
    pts_per_sp = 40            # >= 30 so no superpoint is "small"
    N = S * pts_per_sp         # 160 points per view
    CIN = 8                    # backbone_in_channels
    COUT = 32                  # backbone_out_channels

    params = init_params(k_param, CIN, COUT)

    region = np.repeat(np.arange(S, dtype=np.int32), pts_per_sp)
    data_dict = dict(
        view1_origin_coord=jax.random.normal(k_c1, (N, 3), jnp.float32),
        view1_coord=jax.random.normal(k_c1, (N, 3), jnp.float32),
        view1_feat=jax.random.normal(k_f1, (N, CIN), jnp.float32),
        view1_offset=jnp.array([N], jnp.int32),
        view2_origin_coord=jax.random.normal(k_c2, (N, 3), jnp.float32),
        view2_coord=jax.random.normal(k_c2, (N, 3), jnp.float32),
        view2_feat=jax.random.normal(k_f2, (N, CIN), jnp.float32),
        view2_offset=jnp.array([N], jnp.int32),
        view1_region=region,
        view2_region=region,
        view1_sp_wall_mask=np.array([True, False, False, False]),
        view1_sp_floor_ceil_mask=np.array([False, True, False, False]),
    )

    result = sp_fa_contrast_forward(params, data_dict)
    loss = jax.block_until_ready(result['loss'])
    l_fore = jax.block_until_ready(result['L_fore'])
    l_fore_back = jax.block_until_ready(result['L_fore_back'])

    assert np.isfinite(np.asarray(loss))
    assert np.isfinite(np.asarray(l_fore))
    assert np.isfinite(np.asarray(l_fore_back))
    print("KERNEL_OK")
</pallas_src>

<mosaic_0001>
module attributes {stable_mosaic.version = 11 : i64} {
  func.func @_proj_kernel(%arg0: i32, %arg1: memref<160x128xbf16, #tpu.memory_space<vmem>>, %arg2: memref<128x128xbf16, #tpu.memory_space<vmem>>, %arg3: memref<1x128xf32, #tpu.memory_space<vmem>>, %arg4: memref<128x128xbf16, #tpu.memory_space<vmem>>, %arg5: memref<1x128xf32, #tpu.memory_space<vmem>>, %arg6: memref<160x128xbf16, #tpu.memory_space<vmem>>, %arg7: memref<160x128xbf16, #tpu.memory_space<vmem>>, %arg8: memref<8x128xf32, #tpu.memory_space<vmem>>) attributes {dimension_semantics = [#tpu.dimension_semantics<parallel>], iteration_bounds = array<i64: 1>, scalar_prefetch = 0 : i64, scratch_operands = 0 : i64, tpu.core_type = #tpu.core_type<tc>, window_params = [{transform_indices = @transform_0, window_bounds = array<i64: 160, 128>}, {pipeline_mode = #tpu.pipeline_mode<synchronous>, transform_indices = @transform_1, window_bounds = array<i64: 128, 128>}, {pipeline_mode = #tpu.pipeline_mode<synchronous>, transform_indices = @transform_2, window_bounds = array<i64: 1, 128>}, {pipeline_mode = #tpu.pipeline_mode<synchronous>, transform_indices = @transform_3, window_bounds = array<i64: 128, 128>}, {pipeline_mode = #tpu.pipeline_mode<synchronous>, transform_indices = @transform_4, window_bounds = array<i64: 1, 128>}, {transform_indices = @transform_5, window_bounds = array<i64: 160, 128>}, {transform_indices = @transform_6, window_bounds = array<i64: 160, 128>}, {transform_indices = @transform_7, window_bounds = array<i64: 8, 128>}]} {
    %c0 = arith.constant 0 : index
    %c0_0 = arith.constant 0 : index
    %0 = vector.load %arg1[%c0, %c0_0] : memref<160x128xbf16, #tpu.memory_space<vmem>>, vector<160x128xbf16>
    %c0_1 = arith.constant 0 : index
    %c0_2 = arith.constant 0 : index
    %1 = vector.load %arg2[%c0_1, %c0_2] : memref<128x128xbf16, #tpu.memory_space<vmem>>, vector<128x128xbf16>
    %cst = arith.constant dense<0.000000e+00> : vector<160x128xf32>
    %2 = tpu.matmul %0, %1, %cst {dimension_numbers = #tpu.dot_dimension_numbers<[1], [0], [0], [1], [0, 0, 1, 1], [], []>} : vector<160x128xbf16>, vector<128x128xbf16>, vector<160x128xf32> -> vector<160x128xf32>
    %c0_3 = arith.constant 0 : index
    %c0_4 = arith.constant 0 : index
    %3 = vector.load %arg3[%c0_3, %c0_4] : memref<1x128xf32, #tpu.memory_space<vmem>>, vector<1x128xf32>
    %4 = vector.broadcast %3 : vector<1x128xf32> to vector<160x128xf32>
    %5 = arith.addf %2, %4 : vector<160x128xf32>
    %cst_5 = arith.constant 0.000000e+00 : f32
    %6 = vector.broadcast %cst_5 : f32 to vector<160x128xf32>
    %7 = arith.maximumf %5, %6 : vector<160x128xf32>
    %8 = arith.truncf %7 : vector<160x128xf32> to vector<160x128xbf16>
    %c0_6 = arith.constant 0 : index
    %c0_7 = arith.constant 0 : index
    %9 = vector.load %arg4[%c0_6, %c0_7] : memref<128x128xbf16, #tpu.memory_space<vmem>>, vector<128x128xbf16>
    %cst_8 = arith.constant dense<0.000000e+00> : vector<160x128xf32>
    %10 = tpu.matmul %8, %9, %cst_8 {dimension_numbers = #tpu.dot_dimension_numbers<[1], [0], [0], [1], [0, 0, 1, 1], [], []>} : vector<160x128xbf16>, vector<128x128xbf16>, vector<160x128xf32> -> vector<160x128xf32>
    %c0_9 = arith.constant 0 : index
    %c0_10 = arith.constant 0 : index
    %11 = vector.load %arg5[%c0_9, %c0_10] : memref<1x128xf32, #tpu.memory_space<vmem>>, vector<1x128xf32>
    %12 = vector.broadcast %11 : vector<1x128xf32> to vector<160x128xf32>
    %13 = arith.addf %10, %12 : vector<160x128xf32>
    %c0_11 = arith.constant 0 : index
    %c0_12 = arith.constant 0 : index
    %14 = vector.load %arg6[%c0_11, %c0_12] : memref<160x128xbf16, #tpu.memory_space<vmem>>, vector<160x128xbf16>
    tpu.vector_store %arg6[%c0_11, %c0_12], %8 {strides = array<i32>} : memref<160x128xbf16, #tpu.memory_space<vmem>>, vector<160x128xbf16>,
    %15 = arith.truncf %13 : vector<160x128xf32> to vector<160x128xbf16>
    %c0_13 = arith.constant 0 : index
    %c0_14 = arith.constant 0 : index
    %16 = vector.load %arg7[%c0_13, %c0_14] : memref<160x128xbf16, #tpu.memory_space<vmem>>, vector<160x128xbf16>
    tpu.vector_store %arg7[%c0_13, %c0_14], %15 {strides = array<i32>} : memref<160x128xbf16, #tpu.memory_space<vmem>>, vector<160x128xbf16>,
    %cst_15 = arith.constant dense<0.000000e+00> : vector<128xf32>
    %17 = vector.multi_reduction <add>, %13, %cst_15 [0] : vector<160x128xf32> to vector<128xf32>
    %18 = vector.shape_cast %17 : vector<128xf32> to vector<1x128xf32>
    %c0_16 = arith.constant 0 : index
    %c0_17 = arith.constant 0 : index
    %19 = vector.load %arg8[%c0_16, %c0_17] : memref<8x128xf32, #tpu.memory_space<vmem>>, vector<1x128xf32>
    tpu.vector_store %arg8[%c0_16, %c0_17], %18 {strides = array<i32>} : memref<8x128xf32, #tpu.memory_space<vmem>>, vector<1x128xf32>,
    %20 = arith.mulf %13, %13 : vector<160x128xf32>
    %cst_18 = arith.constant dense<0.000000e+00> : vector<128xf32>
    %21 = vector.multi_reduction <add>, %20, %cst_18 [0] : vector<160x128xf32> to vector<128xf32>
    %22 = vector.shape_cast %21 : vector<128xf32> to vector<1x128xf32>
    %c1 = arith.constant 1 : index
    %c0_19 = arith.constant 0 : index
    %23 = vector.load %arg8[%c1, %c0_19] : memref<8x128xf32, #tpu.memory_space<vmem>>, vector<1x128xf32>
    tpu.vector_store %arg8[%c1, %c0_19], %22 {strides = array<i32>} : memref<8x128xf32, #tpu.memory_space<vmem>>, vector<1x128xf32>,
    return
  }
  func.func @transform_0(%arg0: i32) -> (i32, i32) {
    %c0_i32 = arith.constant 0 : i32
    %c0_i32_0 = arith.constant 0 : i32
    return %arg0, %c0_i32 : i32, i32
  }
  func.func @transform_1(%arg0: i32) -> (i32, i32) {
    %c0_i32 = arith.constant 0 : i32
    %c0_i32_0 = arith.constant 0 : i32
    %c0_i32_1 = arith.constant 0 : i32
    return %c0_i32, %c0_i32_0 : i32, i32
  }
  func.func @transform_2(%arg0: i32) -> (i32, i32) {
    %c0_i32 = arith.constant 0 : i32
    %c0_i32_0 = arith.constant 0 : i32
    %c0_i32_1 = arith.constant 0 : i32
    return %c0_i32, %c0_i32_0 : i32, i32
  }
  func.func @transform_3(%arg0: i32) -> (i32, i32) {
    %c0_i32 = arith.constant 0 : i32
    %c0_i32_0 = arith.constant 0 : i32
    %c0_i32_1 = arith.constant 0 : i32
    return %c0_i32, %c0_i32_0 : i32, i32
  }
  func.func @transform_4(%arg0: i32) -> (i32, i32) {
    %c0_i32 = arith.constant 0 : i32
    %c0_i32_0 = arith.constant 0 : i32
    %c0_i32_1 = arith.constant 0 : i32
    return %c0_i32, %c0_i32_0 : i32, i32
  }
  func.func @transform_5(%arg0: i32) -> (i32, i32) {
    %c0_i32 = arith.constant 0 : i32
    %c0_i32_0 = arith.constant 0 : i32
    return %arg0, %c0_i32 : i32, i32
  }
  func.func @transform_6(%arg0: i32) -> (i32, i32) {
    %c0_i32 = arith.constant 0 : i32
    %c0_i32_0 = arith.constant 0 : i32
    return %arg0, %c0_i32 : i32, i32
  }
  func.func @transform_7(%arg0: i32) -> (i32, i32) {
    %c0_i32 = arith.constant 0 : i32
    %c0_i32_0 = arith.constant 0 : i32
    return %arg0, %c0_i32 : i32, i32
  }
}

</mosaic_0001>

<llo_original>
// kernel: tpu_custom_call.1
$region0: #{tpu_custom_call.1}
  #allocation0 [shape = 'u32[]', space=smem, size = 0x4, offset = 0x4, fixed_abs, tag = 'smem constant byte address 0x4 - core index']
  #allocation1 [shape = 'u32[144,128]{1,0:T(1,128)}', space=vmem, size = 0x12000, scoped, tag = 'internal scratch']
  %s0 = inlined_call_operand.hbm [shape: bf16[160,128], index: 0, kind: input, shape index: {}]
  %s1 = inlined_call_operand.hbm [shape: bf16[128,128], index: 1, kind: input, shape index: {}]
  %s2 = inlined_call_operand.vmem [shape: f32[1,128], index: 2, kind: input, shape index: {}]
  %s3 = inlined_call_operand.hbm [shape: bf16[128,128], index: 3, kind: input, shape index: {}]
  %s4 = inlined_call_operand.vmem [shape: f32[1,128], index: 4, kind: input, shape index: {}]
  %s5 = inlined_call_operand.hbm [shape: bf16[160,128], index: 5, kind: output, shape index: {0}]
  %s6 = inlined_call_operand.hbm [shape: bf16[160,128], index: 6, kind: output, shape index: {1}]
  %s7 = inlined_call_operand.hbm [shape: f32[8,128], index: 7, kind: output, shape index: {2}]
  %8 = xla_tuple %s5, %s6, %s7
  %s9 = sld [smem:[#allocation0]]
  $region58: #{tpu_custom_call.1} parent=0
    _
  %s11 = ssub.s32 1, %s9
  %s12 = scalar_select 0, %s11, %s9
  $region1: #{tpu_custom_call.1} parent=0
    #allocation2 [shape = 'u8[40960]{0}', space=vmem, size = 0xa000, scoped, tag = 'input window, operand 0, single buffered']
    #allocation3 [shape = 's32[1]{0}', space=sflag, size = 0x4, scoped, tag = 'scoped memory for tpu_custom_call.1']
    #allocation4 [shape = 's32[1]{0}', space=sflag, size = 0x4, scoped, tag = 'scoped memory for tpu_custom_call.1']
    #allocation5 [shape = 'u8[32768]{0}', space=vmem, size = 0x8000, scoped, tag = 'input window, operand 1, single buffered']
    #allocation6 [shape = 's32[1]{0}', space=sflag, size = 0x4, scoped, tag = 'scoped memory for tpu_custom_call.1']
    #allocation7 [shape = 'u8[32768]{0}', space=vmem, size = 0x8000, scoped, tag = 'input window, operand 3, single buffered']
    #allocation8 [shape = 'u8[40960]{0}', space=vmem, size = 0xa000, scoped, tag = 'output window, operand 0, single buffered']
    #allocation9 [shape = 'u8[40960]{0}', space=vmem, size = 0xa000, scoped, tag = 'output window, operand 1, single buffered']
    #allocation10 [shape = 's32[1]{0}', space=sflag, size = 0x4, scoped, tag = 'scoped memory for tpu_custom_call.1']
    #allocation11 [shape = 'u8[4096]{0}', space=vmem, size = 0x1000, scoped, tag = 'output window, operand 2, single buffered']
    %13 = vsyncpa [#allocation3], 0
    %14 = vsyncpa [#allocation6], 0
    %15 = vsyncpa [#allocation4], 0
    %16 = vsyncpa [#allocation10], 0
    // Predicated region
    $region2: #{tpu_custom_call.1} parent=1 // pred_check
      _
    $region3: #{tpu_custom_call.1} parent=1 // pred_check_branch
      %18 = sbr.rel (0) target = $region5
    $region4: #{tpu_custom_call.1} parent=1 // pred_region
      %s20 = ssub.s32 1280, 1280
      %21 = vsyncadd [#allocation3], %s20
      %s22 = sshll.u32 [#allocation2], 4
      %s23 = int_to_ptr.vmem [resolvable:$true] %s22
      %28 = dma.hbm_to_vmem [thread:$0]  %s0, 1280, %s23, [#allocation3], 64, 64, 4
    $region5: #{tpu_custom_call.1} parent=1 // pred_fallthru
      _
    // Predicated region
    $region6: #{tpu_custom_call.1} parent=1 // pred_check
      _
    $region7: #{tpu_custom_call.1} parent=1 // pred_check_branch
      %30 = sbr.rel (0) target = $region9
    $region8: #{tpu_custom_call.1} parent=1 // pred_region
      %s32 = ssub.s32 1024, 1024
      %33 = vsyncadd [#allocation6], %s32
      %s34 = sshll.u32 [#allocation5], 4
      %s35 = int_to_ptr.vmem [resolvable:$true] %s34
      %40 = dma.hbm_to_vmem [thread:$0]  %s1, 1024, %s35, [#allocation6], 64, 64, 4
    $region9: #{tpu_custom_call.1} parent=1 // pred_fallthru
      _
    // Predicated region
    $region10: #{tpu_custom_call.1} parent=1 // pred_check
      _
    $region11: #{tpu_custom_call.1} parent=1 // pred_check_branch
      %42 = sbr.rel (0) target = $region13
    $region12: #{tpu_custom_call.1} parent=1 // pred_region
      _
    $region13: #{tpu_custom_call.1} parent=1 // pred_fallthru
      _
    // Predicated region
    $region14: #{tpu_custom_call.1} parent=1 // pred_check
      _
    $region15: #{tpu_custom_call.1} parent=1 // pred_check_branch
      %44 = sbr.rel (0) target = $region17
    $region16: #{tpu_custom_call.1} parent=1 // pred_region
      %s46 = ssub.s32 1024, 1024
      %47 = vsyncadd [#allocation6], %s46
      %s48 = sshll.u32 [#allocation7], 4
      %s49 = int_to_ptr.vmem [resolvable:$true] %s48
      %54 = dma.hbm_to_vmem [thread:$0]  %s3, 1024, %s49, [#allocation6], 64, 64, 4
    $region17: #{tpu_custom_call.1} parent=1 // pred_fallthru
      _
    // Predicated region
    $region18: #{tpu_custom_call.1} parent=1 // pred_check
      _
    $region19: #{tpu_custom_call.1} parent=1 // pred_check_branch
      %56 = sbr.rel (0) target = $region21
    $region20: #{tpu_custom_call.1} parent=1 // pred_region
      _
    $region21: #{tpu_custom_call.1} parent=1 // pred_fallthru
      _
    // Predicated region
    $region22: #{tpu_custom_call.1} parent=1 // pred_check
      _
    $region23: #{tpu_custom_call.1} parent=1 // pred_check_branch
      %58 = sbr.rel (0) target = $region25
    $region24: #{tpu_custom_call.1} parent=1 // pred_region
      %59 = dma.done [#allocation3], 1280
    $region25: #{tpu_custom_call.1} parent=1 // pred_fallthru
      _
    // Predicated region
    $region26: #{tpu_custom_call.1} parent=1 // pred_check
      _
    $region27: #{tpu_custom_call.1} parent=1 // pred_check_branch
      %61 = sbr.rel (0) target = $region29
    $region28: #{tpu_custom_call.1} parent=1 // pred_region
      %62 = dma.done [#allocation6], 1024
    $region29: #{tpu_custom_call.1} parent=1 // pred_fallthru
      _
    // Predicated region
    $region30: #{tpu_custom_call.1} parent=1 // pred_check
      _
    $region31: #{tpu_custom_call.1} parent=1 // pred_check_branch
      %64 = sbr.rel (0) target = $region33
    $region32: #{tpu_custom_call.1} parent=1 // pred_region
      %65 = dma.done [#allocation6], 1024
    $region33: #{tpu_custom_call.1} parent=1 // pred_fallthru
      _
    %v67 = vld [vmem:[#allocation2] sm:$0xf]
    %v68 = vld [vmem:[#allocation2 + $0x4] sm:$0xf]
    %v69 = vld [vmem:[#allocation2 + $0x8] sm:$0xf]
    %v70 = vld [vmem:[#allocation2 + $0xc] sm:$0xf]
    %v71 = vld [vmem:[#allocation2 + $0x10] sm:$0xf]
    %v72 = vld [vmem:[#allocation2 + $0x14] sm:$0xf]
    %v73 = vld [vmem:[#allocation2 + $0x18] sm:$0xf]
    %v74 = vld [vmem:[#allocation2 + $0x1c] sm:$0xf]
    %v75 = vld [vmem:[#allocation2 + $0x20] sm:$0xf]
    %v76 = vld [vmem:[#allocation2 + $0x24] sm:$0xf]
    %v77 = vld [vmem:[#allocation2 + $0x28] sm:$0xf]
    %v78 = vld [vmem:[#allocation2 + $0x2c] sm:$0xf]
    %v79 = vld [vmem:[#allocation2 + $0x30] sm:$0xf]
    %v80 = vld [vmem:[#allocation2 + $0x34] sm:$0xf]
    %v81 = vld [vmem:[#allocation2 + $0x38] sm:$0xf]
    %v82 = vld [vmem:[#allocation2 + $0x3c] sm:$0xf]
    %v83 = vld [vmem:[#allocation2 + $0x40] sm:$0xf]
    %v84 = vld [vmem:[#allocation2 + $0x44] sm:$0xf]
    %v85 = vld [vmem:[#allocation2 + $0x48] sm:$0xf]
    %v86 = vld [vmem:[#allocation2 + $0x4c] sm:$0xf]
    %v87 = vld [vmem:[#allocation5] sm:$0xf]
    %v88 = vld [vmem:[#allocation5 + $0x4] sm:$0xf]
    %v89 = vld [vmem:[#allocation5 + $0x8] sm:$0xf]
    %v90 = vld [vmem:[#allocation5 + $0xc] sm:$0xf]
    %v91 = vld [vmem:[#allocation5 + $0x10] sm:$0xf]
    %v92 = vld [vmem:[#allocation5 + $0x14] sm:$0xf]
    %v93 = vld [vmem:[#allocation5 + $0x18] sm:$0xf]
    %v94 = vld [vmem:[#allocation5 + $0x1c] sm:$0xf]
    %v95 = vld [vmem:[#allocation5 + $0x20] sm:$0xf]
    %v96 = vld [vmem:[#allocation5 + $0x24] sm:$0xf]
    %v97 = vld [vmem:[#allocation5 + $0x28] sm:$0xf]
    %v98 = vld [vmem:[#allocation5 + $0x2c] sm:$0xf]
    %v99 = vld [vmem:[#allocation5 + $0x30] sm:$0xf]
    %v100 = vld [vmem:[#allocation5 + $0x34] sm:$0xf]
    %v101 = vld [vmem:[#allocation5 + $0x38] sm:$0xf]
    %v102 = vld [vmem:[#allocation5 + $0x3c] sm:$0xf]
    %v103 = vld [vmem:[%s2] sm:$0x1]
    %v105 = vlaneseq
    %v106 = vshrl.u32 %v105, 7
    %v107 = vsub.s32 0, %v106
    %v108 = vrot.slane %v103, %v107
    %v130 = vunpack.c.l.b16 %v67
    %v131 = vunpack.c.l.b16 %v68
    %v132 = vunpack.c.l.b16 %v69
    %v133 = vunpack.c.l.b16 %v70
    %v134 = vunpack.c.l.b16 %v71
    %v135 = vunpack.c.l.b16 %v72
    %v136 = vunpack.c.l.b16 %v73
    %v137 = vunpack.c.l.b16 %v74
    %v138 = vunpack.c.l.b16 %v75
    %v139 = vunpack.c.l.b16 %v76
    %v140 = vunpack.c.l.b16 %v77
    %v141 = vunpack.c.l.b16 %v78
    %v142 = vunpack.c.l.b16 %v79
    %v143 = vunpack.c.l.b16 %v80
    %v144 = vunpack.c.l.b16 %v81
    %v145 = vunpack.c.l.b16 %v82
    %v146 = vunpack.c.l.b16 %v83
    %v147 = vunpack.c.l.b16 %v84
    %v148 = vunpack.c.l.b16 %v85
    %v149 = vunpack.c.l.b16 %v86
    %v150 = vpack.c.b16 %v131, %v130
    %v151 = vpack.c.b16 %v133, %v132
    %v152 = vpack.c.b16 %v135, %v134
    %v153 = vpack.c.b16 %v137, %v136
    %v154 = vpack.c.b16 %v139, %v138
    %v155 = vpack.c.b16 %v141, %v140
    %v156 = vpack.c.b16 %v143, %v142
    %v157 = vpack.c.b16 %v145, %v144
    %v158 = vpack.c.b16 %v147, %v146
    %v159 = vpack.c.b16 %v149, %v148
    %v186 = vunpack.c.l.b16 %v87
    %v187 = vunpack.c.l.b16 %v88
    %v188 = vunpack.c.l.b16 %v89
    %v189 = vunpack.c.l.b16 %v90
    %v190 = vunpack.c.l.b16 %v91
    %v191 = vunpack.c.l.b16 %v92
    %v192 = vunpack.c.l.b16 %v93
    %v193 = vunpack.c.l.b16 %v94
    %v194 = vunpack.c.l.b16 %v95
    %v195 = vunpack.c.l.b16 %v96
    %v196 = vunpack.c.l.b16 %v97
    %v197 = vunpack.c.l.b16 %v98
    %v198 = vunpack.c.l.b16 %v99
    %v199 = vunpack.c.l.b16 %v100
    %v200 = vunpack.c.l.b16 %v101
    %v201 = vunpack.c.l.b16 %v102
    %v202 = vpack.c.b16 %v187, %v186
    %v203 = vpack.c.b16 %v189, %v188
    %v204 = vpack.c.b16 %v191, %v190
    %v205 = vpack.c.b16 %v193, %v192
    %v206 = vpack.c.b16 %v195, %v194
    %v207 = vpack.c.b16 %v197, %v196
    %v208 = vpack.c.b16 %v199, %v198
    %v209 = vpack.c.b16 %v201, %v200
    %218 = vmatprep.subr.bf16.mxu0 0
    %219 = vmatpush1.bf16.msra.mxu0 %v202
    %220 = vmatprep.subr.bf16.mxu0 0
    %221 = vmatpush1.bf16.msra.mxu0 %v203
    %222 = vmatprep.subr.bf16.mxu0 0
    %223 = vmatpush1.bf16.msra.mxu0 %v204
    %224 = vmatprep.subr.bf16.mxu0 0
    %225 = vmatpush1.bf16.msra.mxu0 %v205
    %226 = vmatprep.subr.bf16.mxu0 0
    %227 = vmatpush1.bf16.msra.mxu0 %v206
    %228 = vmatprep.subr.bf16.mxu0 0
    %229 = vmatpush1.bf16.msra.mxu0 %v207
    %230 = vmatprep.subr.bf16.mxu0 0
    %231 = vmatpush1.bf16.msra.mxu0 %v208
    %232 = vmatprep.subr.bf16.mxu0 0
    %233 = vmatpush1.bf16.msra.mxu0 %v209
    %234 = vmatprep.subr.bf16.mxu0 0
    %235 = vmatpush1.bf16.msra.mxu0 0
    %236 = vmatprep.subr.bf16.mxu0 0
    %237 = vmatpush1.bf16.msra.mxu0 0
    %238 = vmatprep.subr.bf16.mxu0 0
    %239 = vmatpush1.bf16.msra.mxu0 0
    %240 = vmatprep.subr.bf16.mxu0 0
    %241 = vmatpush1.bf16.msra.mxu0 0
    %242 = vmatprep.subr.bf16.mxu0 0
    %243 = vmatpush1.bf16.msra.mxu0 0
    %244 = vmatprep.subr.bf16.mxu0 0
    %245 = vmatpush1.bf16.msra.mxu0 0
    %246 = vmatprep.subr.bf16.mxu0 0
    %247 = vmatpush1.bf16.msra.mxu0 0
    %248 = vmatprep.subr.bf16.mxu0 0
    %249 = vmatpush1.bf16.msra.mxu0 0
    %250 = vmatprep.mubr.bf16.mxu0 0
    %251 = vmatmul.mubr.bf16.gmra.mrb[0].mxu0 %v150
    %v252 = vpop.f32.mrb[0].mxu0
    %v253 = vadd.f32 %v108, %v252
    %v254 = vpop.f32.mrb[0].mxu0
    %v255 = vpop.f32.mrb[0].mxu0
    %v256 = vadd.f32 %v108, %v255
    %v257 = vpop.f32.mrb[0].mxu0
    %258 = vmatprep.mubr.bf16.mxu0 0
    %259 = vmatmul.mubr.bf16.gmra.mrb[0].mxu0 %v151
    %v260 = vpop.f32.mrb[0].mxu0
    %v261 = vadd.f32 %v108, %v260
    %v262 = vpop.f32.mrb[0].mxu0
    %v263 = vpop.f32.mrb[0].mxu0
    %v264 = vadd.f32 %v108, %v263
    %v265 = vpop.f32.mrb[0].mxu0
    %266 = vmatprep.mubr.bf16.mxu0 0
    %267 = vmatmul.mubr.bf16.gmra.mrb[0].mxu0 %v152
    %v268 = vpop.f32.mrb[0].mxu0
    %v269 = vadd.f32 %v108, %v268
    %v270 = vpop.f32.mrb[0].mxu0
    %v271 = vpop.f32.mrb[0].mxu0
    %v272 = vadd.f32 %v108, %v271
    %v273 = vpop.f32.mrb[0].mxu0
    %274 = vmatprep.mubr.bf16.mxu0 0
    %275 = vmatmul.mubr.bf16.gmra.mrb[0].mxu0 %v153
    %v276 = vpop.f32.mrb[0].mxu0
    %v277 = vadd.f32 %v108, %v276
    %v278 = vpop.f32.mrb[0].mxu0
    %v279 = vpop.f32.mrb[0].mxu0
    %v280 = vadd.f32 %v108, %v279
    %v281 = vpop.f32.mrb[0].mxu0
    %282 = vmatprep.mubr.bf16.mxu0 0
    %283 = vmatmul.mubr.bf16.gmra.mrb[0].mxu0 %v154
    %v284 = vpop.f32.mrb[0].mxu0
    %v285 = vadd.f32 %v108, %v284
    %v286 = vpop.f32.mrb[0].mxu0
    %v287 = vpop.f32.mrb[0].mxu0
    %v288 = vadd.f32 %v108, %v287
    %v289 = vpop.f32.mrb[0].mxu0
    %290 = vmatprep.mubr.bf16.mxu0 0
    %291 = vmatmul.mubr.bf16.gmra.mrb[0].mxu0 %v155
    %v292 = vpop.f32.mrb[0].mxu0
    %v293 = vadd.f32 %v108, %v292
    %v294 = vpop.f32.mrb[0].mxu0
    %v295 = vpop.f32.mrb[0].mxu0
    %v296 = vadd.f32 %v108, %v295
    %v297 = vpop.f32.mrb[0].mxu0
    %298 = vmatprep.mubr.bf16.mxu0 0
    %299 = vmatmul.mubr.bf16.gmra.mrb[0].mxu0 %v156
    %v300 = vpop.f32.mrb[0].mxu0
    %v301 = vadd.f32 %v108, %v300
    %v302 = vpop.f32.mrb[0].mxu0
    %v303 = vpop.f32.mrb[0].mxu0
    %v304 = vadd.f32 %v108, %v303
    %v305 = vpop.f32.mrb[0].mxu0
    %306 = vmatprep.mubr.bf16.mxu0 0
    %307 = vmatmul.mubr.bf16.gmra.mrb[0].mxu0 %v157
    %v308 = vpop.f32.mrb[0].mxu0
    %v309 = vadd.f32 %v108, %v308
    %v310 = vpop.f32.mrb[0].mxu0
    %v311 = vpop.f32.mrb[0].mxu0
    %v312 = vadd.f32 %v108, %v311
    %v313 = vpop.f32.mrb[0].mxu0
    %314 = vmatprep.mubr.bf16.mxu0 0
    %315 = vmatmul.mubr.bf16.gmra.mrb[0].mxu0 %v158
    %v316 = vpop.f32.mrb[0].mxu0
    %v317 = vadd.f32 %v108, %v316
    %v318 = vpop.f32.mrb[0].mxu0
    %v319 = vpop.f32.mrb[0].mxu0
    %v320 = vadd.f32 %v108, %v319
    %v321 = vpop.f32.mrb[0].mxu0
    %322 = vmatprep.mubr.bf16.mxu0 0
    %323 = vmatmul.mubr.bf16.gmra.mrb[0].mxu0 %v159
    %v324 = vpop.f32.mrb[0].mxu0
    %v325 = vadd.f32 %v108, %v324
    %v326 = vpop.f32.mrb[0].mxu0
    %v327 = vpop.f32.mrb[0].mxu0
    %v328 = vadd.f32 %v108, %v327
    %v329 = vpop.f32.mrb[0].mxu0
    %330 = vdwg.mxu0
    %v331 = vmax.f32 %v253, 0.0
    %v332 = vmax.f32 %v256, 0.0
    %v333 = vmax.f32 %v261, 0.0
    %v334 = vmax.f32 %v264, 0.0
    %v335 = vmax.f32 %v269, 0.0
    %v336 = vmax.f32 %v272, 0.0
    %v337 = vmax.f32 %v277, 0.0
    %v338 = vmax.f32 %v280, 0.0
    %v339 = vmax.f32 %v285, 0.0
    %v340 = vmax.f32 %v288, 0.0
    %v341 = vmax.f32 %v293, 0.0
    %v342 = vmax.f32 %v296, 0.0
    %v343 = vmax.f32 %v301, 0.0
    %v344 = vmax.f32 %v304, 0.0
    %v345 = vmax.f32 %v309, 0.0
    %v346 = vmax.f32 %v312, 0.0
    %v347 = vmax.f32 %v317, 0.0
    %v348 = vmax.f32 %v320, 0.0
    %v349 = vmax.f32 %v325, 0.0
    %v350 = vmax.f32 %v328, 0.0
    %v351 = vpack.c.bf16 %v332, %v331
    %v352 = vpack.c.bf16 %v334, %v333
    %v353 = vpack.c.bf16 %v336, %v335
    %v354 = vpack.c.bf16 %v338, %v337
    %v355 = vpack.c.bf16 %v340, %v339
    %v356 = vpack.c.bf16 %v342, %v341
    %v357 = vpack.c.bf16 %v344, %v343
    %v358 = vpack.c.bf16 %v346, %v345
    %v359 = vpack.c.bf16 %v348, %v347
    %v360 = vpack.c.bf16 %v350, %v349
    %v361 = vld [vmem:[#allocation7] sm:$0xf]
    %v362 = vld [vmem:[#allocation7 + $0x4] sm:$0xf]
    %v363 = vld [vmem:[#allocation7 + $0x8] sm:$0xf]
    %v364 = vld [vmem:[#allocation7 + $0xc] sm:$0xf]
    %v365 = vld [vmem:[#allocation7 + $0x10] sm:$0xf]
    %v366 = vld [vmem:[#allocation7 + $0x14] sm:$0xf]
    %v367 = vld [vmem:[#allocation7 + $0x18] sm:$0xf]
    %v368 = vld [vmem:[#allocation7 + $0x1c] sm:$0xf]
    %v369 = vld [vmem:[#allocation7 + $0x20] sm:$0xf]
    %v370 = vld [vmem:[#allocation7 + $0x24] sm:$0xf]
    %v371 = vld [vmem:[#allocation7 + $0x28] sm:$0xf]
    %v372 = vld [vmem:[#allocation7 + $0x2c] sm:$0xf]
    %v373 = vld [vmem:[#allocation7 + $0x30] sm:$0xf]
    %v374 = vld [vmem:[#allocation7 + $0x34] sm:$0xf]
    %v375 = vld [vmem:[#allocation7 + $0x38] sm:$0xf]
    %v376 = vld [vmem:[#allocation7 + $0x3c] sm:$0xf]
    %v377 = vld [vmem:[%s4] sm:$0x1]
    %v379 = vlaneseq
    %v380 = vshrl.u32 %v379, 7
    %v381 = vsub.s32 0, %v380
    %v382 = vrot.slane %v377, %v381
    %v400 = vunpack.c.l.b16 %v361
    %v401 = vunpack.c.l.b16 %v362
    %v402 = vunpack.c.l.b16 %v363
    %v403 = vunpack.c.l.b16 %v364
    %v404 = vunpack.c.l.b16 %v365
    %v405 = vunpack.c.l.b16 %v366
    %v406 = vunpack.c.l.b16 %v367
    %v407 = vunpack.c.l.b16 %v368
    %v408 = vunpack.c.l.b16 %v369
    %v409 = vunpack.c.l.b16 %v370
    %v410 = vunpack.c.l.b16 %v371
    %v411 = vunpack.c.l.b16 %v372
    %v412 = vunpack.c.l.b16 %v373
    %v413 = vunpack.c.l.b16 %v374
    %v414 = vunpack.c.l.b16 %v375
    %v415 = vunpack.c.l.b16 %v376
    %v416 = vpack.c.b16 %v401, %v400
    %v417 = vpack.c.b16 %v403, %v402
    %v418 = vpack.c.b16 %v405, %v404
    %v419 = vpack.c.b16 %v407, %v406
    %v420 = vpack.c.b16 %v409, %v408
    %v421 = vpack.c.b16 %v411, %v410
    %v422 = vpack.c.b16 %v413, %v412
    %v423 = vpack.c.b16 %v415, %v414
    %432 = vmatprep.subr.bf16.mxu0 0
    %433 = vmatpush1.bf16.msra.mxu0 %v416
    %434 = vmatprep.subr.bf16.mxu0 0
    %435 = vmatpush1.bf16.msra.mxu0 %v417
    %436 = vmatprep.subr.bf16.mxu0 0
    %437 = vmatpush1.bf16.msra.mxu0 %v418
    %438 = vmatprep.subr.bf16.mxu0 0
    %439 = vmatpush1.bf16.msra.mxu0 %v419
    %440 = vmatprep.subr.bf16.mxu0 0
    %441 = vmatpush1.bf16.msra.mxu0 %v420
    %442 = vmatprep.subr.bf16.mxu0 0
    %443 = vmatpush1.bf16.msra.mxu0 %v421
    %444 = vmatprep.subr.bf16.mxu0 0
    %445 = vmatpush1.bf16.msra.mxu0 %v422
    %446 = vmatprep.subr.bf16.mxu0 0
    %447 = vmatpush1.bf16.msra.mxu0 %v423
    %448 = vmatprep.subr.bf16.mxu0 0
    %449 = vmatpush1.bf16.msra.mxu0 0
    %450 = vmatprep.subr.bf16.mxu0 0
    %451 = vmatpush1.bf16.msra.mxu0 0
    %452 = vmatprep.subr.bf16.mxu0 0
    %453 = vmatpush1.bf16.msra.mxu0 0
    %454 = vmatprep.subr.bf16.mxu0 0
    %455 = vmatpush1.bf16.msra.mxu0 0
    %456 = vmatprep.subr.bf16.mxu0 0
    %457 = vmatpush1.bf16.msra.mxu0 0
    %458 = vmatprep.subr.bf16.mxu0 0
    %459 = vmatpush1.bf16.msra.mxu0 0
    %460 = vmatprep.subr.bf16.mxu0 0
    %461 = vmatpush1.bf16.msra.mxu0 0
    %462 = vmatprep.subr.bf16.mxu0 0
    %463 = vmatpush1.bf16.msra.mxu0 0
    %464 = vmatprep.mubr.bf16.mxu0 0
    %465 = vmatmul.mubr.bf16.gmra.mrb[0].mxu0 %v351
    %v466 = vpop.f32.mrb[0].mxu0
    %v467 = vadd.f32 %v382, %v466
    %v468 = vpop.f32.mrb[0].mxu0
    %v469 = vpop.f32.mrb[0].mxu0
    %v470 = vadd.f32 %v382, %v469
    %v471 = vpop.f32.mrb[0].mxu0
    %472 = vmatprep.mubr.bf16.mxu0 0
    %473 = vmatmul.mubr.bf16.gmra.mrb[0].mxu0 %v352
    %v474 = vpop.f32.mrb[0].mxu0
    %v475 = vadd.f32 %v382, %v474
    %v476 = vpop.f32.mrb[0].mxu0
    %v477 = vpop.f32.mrb[0].mxu0
    %v478 = vadd.f32 %v382, %v477
    %v479 = vpop.f32.mrb[0].mxu0
    %480 = vmatprep.mubr.bf16.mxu0 0
    %481 = vmatmul.mubr.bf16.gmra.mrb[0].mxu0 %v353
    %v482 = vpop.f32.mrb[0].mxu0
    %v483 = vadd.f32 %v382, %v482
    %v484 = vpop.f32.mrb[0].mxu0
    %v485 = vpop.f32.mrb[0].mxu0
    %v486 = vadd.f32 %v382, %v485
    %v487 = vpop.f32.mrb[0].mxu0
    %488 = vmatprep.mubr.bf16.mxu0 0
    %489 = vmatmul.mubr.bf16.gmra.mrb[0].mxu0 %v354
    %v490 = vpop.f32.mrb[0].mxu0
    %v491 = vadd.f32 %v382, %v490
    %v492 = vpop.f32.mrb[0].mxu0
    %v493 = vpop.f32.mrb[0].mxu0
    %v494 = vadd.f32 %v382, %v493
    %v495 = vpop.f32.mrb[0].mxu0
    %496 = vmatprep.mubr.bf16.mxu0 0
    %497 = vmatmul.mubr.bf16.gmra.mrb[0].mxu0 %v355
    %v498 = vpop.f32.mrb[0].mxu0
    %v499 = vadd.f32 %v382, %v498
    %v500 = vpop.f32.mrb[0].mxu0
    %v501 = vpop.f32.mrb[0].mxu0
    %v502 = vadd.f32 %v382, %v501
    %v503 = vpop.f32.mrb[0].mxu0
    %504 = vmatprep.mubr.bf16.mxu0 0
    %505 = vmatmul.mubr.bf16.gmra.mrb[0].mxu0 %v356
    %v506 = vpop.f32.mrb[0].mxu0
    %v507 = vadd.f32 %v382, %v506
    %v508 = vpop.f32.mrb[0].mxu0
    %v509 = vpop.f32.mrb[0].mxu0
    %v510 = vadd.f32 %v382, %v509
    %v511 = vpop.f32.mrb[0].mxu0
    %512 = vmatprep.mubr.bf16.mxu0 0
    %513 = vmatmul.mubr.bf16.gmra.mrb[0].mxu0 %v357
    %v514 = vpop.f32.mrb[0].mxu0
    %v515 = vadd.f32 %v382, %v514
    %v516 = vpop.f32.mrb[0].mxu0
    %v517 = vpop.f32.mrb[0].mxu0
    %v518 = vadd.f32 %v382, %v517
    %v519 = vpop.f32.mrb[0].mxu0
    %520 = vmatprep.mubr.bf16.mxu0 0
    %521 = vmatmul.mubr.bf16.gmra.mrb[0].mxu0 %v358
    %v522 = vpop.f32.mrb[0].mxu0
    %v523 = vadd.f32 %v382, %v522
    %v524 = vpop.f32.mrb[0].mxu0
    %v525 = vpop.f32.mrb[0].mxu0
    %v526 = vadd.f32 %v382, %v525
    %v527 = vpop.f32.mrb[0].mxu0
    %528 = vmatprep.mubr.bf16.mxu0 0
    %529 = vmatmul.mubr.bf16.gmra.mrb[0].mxu0 %v359
    %v530 = vpop.f32.mrb[0].mxu0
    %v531 = vadd.f32 %v382, %v530
    %v532 = vpop.f32.mrb[0].mxu0
    %v533 = vpop.f32.mrb[0].mxu0
    %v534 = vadd.f32 %v382, %v533
    %v535 = vpop.f32.mrb[0].mxu0
    %536 = vmatprep.mubr.bf16.mxu0 0
    %537 = vmatmul.mubr.bf16.gmra.mrb[0].mxu0 %v360
    %v538 = vpop.f32.mrb[0].mxu0
    %v539 = vadd.f32 %v382, %v538
    %v540 = vpop.f32.mrb[0].mxu0
    %v541 = vpop.f32.mrb[0].mxu0
    %v542 = vadd.f32 %v382, %v541
    %v543 = vpop.f32.mrb[0].mxu0
    %544 = vdwg.mxu0
    %v555 = vunpack.c.l.b16 %v351
    %v556 = vunpack.c.h.b16 %v351
    %v557 = vunpack.c.l.b16 %v352
    %v558 = vunpack.c.h.b16 %v352
    %v559 = vunpack.c.l.b16 %v353
    %v560 = vunpack.c.h.b16 %v353
    %v561 = vunpack.c.l.b16 %v354
    %v562 = vunpack.c.h.b16 %v354
    %v563 = vunpack.c.l.b16 %v355
    %v564 = vunpack.c.h.b16 %v355
    %v565 = vunpack.c.l.b16 %v356
    %v566 = vunpack.c.h.b16 %v356
    %v567 = vunpack.c.l.b16 %v357
    %v568 = vunpack.c.h.b16 %v357
    %v569 = vunpack.c.l.b16 %v358
    %v570 = vunpack.c.h.b16 %v358
    %v571 = vunpack.c.l.b16 %v359
    %v572 = vunpack.c.h.b16 %v359
    %v573 = vunpack.c.l.b16 %v360
    %v574 = vunpack.c.h.b16 %v360
    %v575 = vpack.c.b16 %v555, %v555
    %v576 = vpack.c.b16 %v556, %v556
    %v577 = vpack.c.b16 %v557, %v557
    %v578 = vpack.c.b16 %v558, %v558
    %v579 = vpack.c.b16 %v559, %v559
    %v580 = vpack.c.b16 %v560, %v560
    %v581 = vpack.c.b16 %v561, %v561
    %v582 = vpack.c.b16 %v562, %v562
    %v583 = vpack.c.b16 %v563, %v563
    %v584 = vpack.c.b16 %v564, %v564
    %v585 = vpack.c.b16 %v565, %v565
    %v586 = vpack.c.b16 %v566, %v566
    %v587 = vpack.c.b16 %v567, %v567
    %v588 = vpack.c.b16 %v568, %v568
    %v589 = vpack.c.b16 %v569, %v569
    %v590 = vpack.c.b16 %v570, %v570
    %v591 = vpack.c.b16 %v571, %v571
    %v592 = vpack.c.b16 %v572, %v572
    %v593 = vpack.c.b16 %v573, %v573
    %v594 = vpack.c.b16 %v574, %v574
    %615 = vst [vmem:[#allocation8] sm:$0xf] %v575
    %616 = vst [vmem:[#allocation8 + $0x4] sm:$0xf] %v576
    %617 = vst [vmem:[#allocation8 + $0x8] sm:$0xf] %v577
    %618 = vst [vmem:[#allocation8 + $0xc] sm:$0xf] %v578
    %619 = vst [vmem:[#allocation8 + $0x10] sm:$0xf] %v579
    %620 = vst [vmem:[#allocation8 + $0x14] sm:$0xf] %v580
    %621 = vst [vmem:[#allocation8 + $0x18] sm:$0xf] %v581
    %622 = vst [vmem:[#allocation8 + $0x1c] sm:$0xf] %v582
    %623 = vst [vmem:[#allocation8 + $0x20] sm:$0xf] %v583
    %624 = vst [vmem:[#allocation8 + $0x24] sm:$0xf] %v584
    %625 = vst [vmem:[#allocation8 + $0x28] sm:$0xf] %v585
    %626 = vst [vmem:[#allocation8 + $0x2c] sm:$0xf] %v586
    %627 = vst [vmem:[#allocation8 + $0x30] sm:$0xf] %v587
    %628 = vst [vmem:[#allocation8 + $0x34] sm:$0xf] %v588
    %629 = vst [vmem:[#allocation8 + $0x38] sm:$0xf] %v589
    %630 = vst [vmem:[#allocation8 + $0x3c] sm:$0xf] %v590
    %631 = vst [vmem:[#allocation8 + $0x40] sm:$0xf] %v591
    %632 = vst [vmem:[#allocation8 + $0x44] sm:$0xf] %v592
    %633 = vst [vmem:[#allocation8 + $0x48] sm:$0xf] %v593
    %634 = vst [vmem:[#allocation8 + $0x4c] sm:$0xf] %v594
    %v635 = vpack.c.bf16 %v470, %v467
    %v636 = vpack.c.bf16 %v478, %v475
    %v637 = vpack.c.bf16 %v486, %v483
    %v638 = vpack.c.bf16 %v494, %v491
    %v639 = vpack.c.bf16 %v502, %v499
    %v640 = vpack.c.bf16 %v510, %v507
    %v641 = vpack.c.bf16 %v518, %v515
    %v642 = vpack.c.bf16 %v526, %v523
    %v643 = vpack.c.bf16 %v534, %v531
    %v644 = vpack.c.bf16 %v542, %v539
    %v655 = vunpack.c.l.b16 %v635
    %v656 = vunpack.c.h.b16 %v635
    %v657 = vunpack.c.l.b16 %v636
    %v658 = vunpack.c.h.b16 %v636
    %v659 = vunpack.c.l.b16 %v637
    %v660 = vunpack.c.h.b16 %v637
    %v661 = vunpack.c.l.b16 %v638
    %v662 = vunpack.c.h.b16 %v638
    %v663 = vunpack.c.l.b16 %v639
    %v664 = vunpack.c.h.b16 %v639
    %v665 = vunpack.c.l.b16 %v640
    %v666 = vunpack.c.h.b16 %v640
    %v667 = vunpack.c.l.b16 %v641
    %v668 = vunpack.c.h.b16 %v641
    %v669 = vunpack.c.l.b16 %v642
    %v670 = vunpack.c.h.b16 %v642
    %v671 = vunpack.c.l.b16 %v643
    %v672 = vunpack.c.h.b16 %v643
    %v673 = vunpack.c.l.b16 %v644
    %v674 = vunpack.c.h.b16 %v644
    %v675 = vpack.c.b16 %v655, %v655
    %v676 = vpack.c.b16 %v656, %v656
    %v677 = vpack.c.b16 %v657, %v657
    %v678 = vpack.c.b16 %v658, %v658
    %v679 = vpack.c.b16 %v659, %v659
    %v680 = vpack.c.b16 %v660, %v660
    %v681 = vpack.c.b16 %v661, %v661
    %v682 = vpack.c.b16 %v662, %v662
    %v683 = vpack.c.b16 %v663, %v663
    %v684 = vpack.c.b16 %v664, %v664
    %v685 = vpack.c.b16 %v665, %v665
    %v686 = vpack.c.b16 %v666, %v666
    %v687 = vpack.c.b16 %v667, %v667
    %v688 = vpack.c.b16 %v668, %v668
    %v689 = vpack.c.b16 %v669, %v669
    %v690 = vpack.c.b16 %v670, %v670
    %v691 = vpack.c.b16 %v671, %v671
    %v692 = vpack.c.b16 %v672, %v672
    %v693 = vpack.c.b16 %v673, %v673
    %v694 = vpack.c.b16 %v674, %v674
    %715 = vst [vmem:[#allocation9] sm:$0xf] %v675
    %716 = vst [vmem:[#allocation9 + $0x4] sm:$0xf] %v676
    %717 = vst [vmem:[#allocation9 + $0x8] sm:$0xf] %v677
    %718 = vst [vmem:[#allocation9 + $0xc] sm:$0xf] %v678
    %719 = vst [vmem:[#allocation9 + $0x10] sm:$0xf] %v679
    %720 = vst [vmem:[#allocation9 + $0x14] sm:$0xf] %v680
    %721 = vst [vmem:[#allocation9 + $0x18] sm:$0xf] %v681
    %722 = vst [vmem:[#allocation9 + $0x1c] sm:$0xf] %v682
    %723 = vst [vmem:[#allocation9 + $0x20] sm:$0xf] %v683
    %724 = vst [vmem:[#allocation9 + $0x24] sm:$0xf] %v684
    %725 = vst [vmem:[#allocation9 + $0x28] sm:$0xf] %v685
    %726 = vst [vmem:[#allocation9 + $0x2c] sm:$0xf] %v686
    %727 = vst [vmem:[#allocation9 + $0x30] sm:$0xf] %v687
    %728 = vst [vmem:[#allocation9 + $0x34] sm:$0xf] %v688
    %729 = vst [vmem:[#allocation9 + $0x38] sm:$0xf] %v689
    %730 = vst [vmem:[#allocation9 + $0x3c] sm:$0xf] %v690
    %731 = vst [vmem:[#allocation9 + $0x40] sm:$0xf] %v691
    %732 = vst [vmem:[#allocation9 + $0x44] sm:$0xf] %v692
    %733 = vst [vmem:[#allocation9 + $0x48] sm:$0xf] %v693
    %734 = vst [vmem:[#allocation9 + $0x4c] sm:$0xf] %v694
    %v735 = vadd.f32 %v467, %v470
    %v736 = vadd.f32 %v735, %v475
    %v737 = vadd.f32 %v736, %v478
    %v738 = vadd.f32 %v737, %v483
    %v739 = vadd.f32 %v738, %v486
    %v740 = vadd.f32 %v739, %v491
    %v741 = vadd.f32 %v740, %v494
    %v742 = vadd.f32 %v741, %v499
    %v743 = vadd.f32 %v742, %v502
    %v744 = vadd.f32 %v743, %v507
    %v745 = vadd.f32 %v744, %v510
    %v746 = vadd.f32 %v745, %v515
    %v747 = vadd.f32 %v746, %v518
    %v748 = vadd.f32 %v747, %v523
    %v749 = vadd.f32 %v748, %v526
    %v750 = vadd.f32 %v749, %v531
    %v751 = vadd.f32 %v750, %v534
    %v752 = vadd.f32 %v751, %v539
    %v753 = vadd.f32 %v752, %v542
    %v754 = vrot.slane %v753, 4
    %v755 = vadd.f32 %v753, %v754
    %v756 = vrot.slane %v755, 2
    %v757 = vadd.f32 %v755, %v756
    %v758 = vrot.slane %v757, 1
    %v759 = vadd.f32 %v757, %v758
    %760 = vst [vmem:[#allocation11] sm:$0x1] %v759
    %v761 = vmul.f32 %v467, %v467
    %v762 = vmul.f32 %v470, %v470
    %v763 = vmul.f32 %v475, %v475
    %v764 = vmul.f32 %v478, %v478
    %v765 = vmul.f32 %v483, %v483
    %v766 = vmul.f32 %v486, %v486
    %v767 = vmul.f32 %v491, %v491
    %v768 = vmul.f32 %v494, %v494
    %v769 = vmul.f32 %v499, %v499
    %v770 = vmul.f32 %v502, %v502
    %v771 = vmul.f32 %v507, %v507
    %v772 = vmul.f32 %v510, %v510
    %v773 = vmul.f32 %v515, %v515
    %v774 = vmul.f32 %v518, %v518
    %v775 = vmul.f32 %v523, %v523
    %v776 = vmul.f32 %v526, %v526
    %v777 = vmul.f32 %v531, %v531
    %v778 = vmul.f32 %v534, %v534
    %v779 = vmul.f32 %v539, %v539
    %v780 = vmul.f32 %v542, %v542
    %v781 = vadd.f32 %v761, %v762
    %v782 = vadd.f32 %v781, %v763
    %v783 = vadd.f32 %v782, %v764
    %v784 = vadd.f32 %v783, %v765
    %v785 = vadd.f32 %v784, %v766
    %v786 = vadd.f32 %v785, %v767
    %v787 = vadd.f32 %v786, %v768
    %v788 = vadd.f32 %v787, %v769
    %v789 = vadd.f32 %v788, %v770
    %v790 = vadd.f32 %v789, %v771
    %v791 = vadd.f32 %v790, %v772
    %v792 = vadd.f32 %v791, %v773
    %v793 = vadd.f32 %v792, %v774
    %v794 = vadd.f32 %v793, %v775
    %v795 = vadd.f32 %v794, %v776
    %v796 = vadd.f32 %v795, %v777
    %v797 = vadd.f32 %v796, %v778
    %v798 = vadd.f32 %v797, %v779
    %v799 = vadd.f32 %v798, %v780
    %v800 = vrot.slane %v799, 4
    %v801 = vadd.f32 %v799, %v800
    %v802 = vrot.slane %v801, 2
    %v803 = vadd.f32 %v801, %v802
    %v804 = vrot.slane %v803, 1
    %v805 = vadd.f32 %v803, %v804
    %806 = vst [vmem:[#allocation11 + $0x1] sm:$0x1] %v805
    // Predicated region
    $region34: #{tpu_custom_call.1} parent=1 // pred_check
      _
    $region35: #{tpu_custom_call.1} parent=1 // pred_check_branch
      %808 = sbr.rel (0) target = $region37
    $region36: #{tpu_custom_call.1} parent=1 // pred_region
      %s810 = ssub.s32 1280, 1280
      %811 = vsyncadd [#allocation4], %s810
      %s812 = sshll.u32 [#allocation8], 4
      %s813 = int_to_ptr.vmem [resolvable:$true] %s812
      %818 = dma.vmem_to_hbm [thread:$0]  %s813, 1280, %s5, [#allocation4], 64, 64, 4
    $region37: #{tpu_custom_call.1} parent=1 // pred_fallthru
      _
    // Predicated region
    $region38: #{tpu_custom_call.1} parent=1 // pred_check
      _
    $region39: #{tpu_custom_call.1} parent=1 // pred_check_branch
      %820 = sbr.rel (0) target = $region41
    $region40: #{tpu_custom_call.1} parent=1 // pred_region
      %s822 = ssub.s32 1280, 1280
      %823 = vsyncadd [#allocation10], %s822
      %s824 = sshll.u32 [#allocation9], 4
      %s825 = int_to_ptr.vmem [resolvable:$true] %s824
      %830 = dma.vmem_to_hbm [thread:$0]  %s825, 1280, %s6, [#allocation10], 64, 64, 4
    $region41: #{tpu_custom_call.1} parent=1 // pred_fallthru
      _
    // Predicated region
    $region42: #{tpu_custom_call.1} parent=1 // pred_check
      _
    $region43: #{tpu_custom_call.1} parent=1 // pred_check_branch
      %832 = sbr.rel (0) target = $region45
    $region44: #{tpu_custom_call.1} parent=1 // pred_region
      %s834 = ssub.s32 128, 128
      %835 = vsyncadd [#allocation10], %s834
      %s837 = sshll.u32 [#allocation11], 4
      %s838 = int_to_ptr.vmem [resolvable:$true] %s837
      %840 = dma.vmem_to_hbm [thread:$0]  %s838, 128, %s7, [#allocation10]
    $region45: #{tpu_custom_call.1} parent=1 // pred_fallthru
      _
    // Predicated region
    $region46: #{tpu_custom_call.1} parent=1 // pred_check
      _
    $region47: #{tpu_custom_call.1} parent=1 // pred_check_branch
      %842 = sbr.rel (0) target = $region49
    $region48: #{tpu_custom_call.1} parent=1 // pred_region
      %843 = dma.done [#allocation4], 1280
    $region49: #{tpu_custom_call.1} parent=1 // pred_fallthru
      _
    // Predicated region
    $region50: #{tpu_custom_call.1} parent=1 // pred_check
      _
    $region51: #{tpu_custom_call.1} parent=1 // pred_check_branch
      %845 = sbr.rel (0) target = $region53
    $region52: #{tpu_custom_call.1} parent=1 // pred_region
      %846 = dma.done [#allocation10], 1280
    $region53: #{tpu_custom_call.1} parent=1 // pred_fallthru
      _
    // Predicated region
    $region54: #{tpu_custom_call.1} parent=1 // pred_check
      _
    $region55: #{tpu_custom_call.1} parent=1 // pred_check_branch
      %848 = sbr.rel (0) target = $region57
    $region56: #{tpu_custom_call.1} parent=1 // pred_region
      %849 = dma.done [#allocation10], 128
    $region57: #{tpu_custom_call.1} parent=1 // pred_fallthru
      _
    %850 = vsyncpa [#allocation3], 1
    %851 = vsyncpa [#allocation6], 1
    %852 = vsyncpa [#allocation4], 1
    %853 = vsyncpa [#allocation10], 1

</llo_original>
